<compile_context>
chip_gen: v5e
topology: v5e:2x2
jax: 0.10.0
libtpu: 0.0.40
codegen_flags: <defaults>
</compile_context>

<pallas_src>
import functools

import jax
import jax.numpy as jnp
from jax.experimental import pallas as pl
from jax.experimental.pallas import tpu as pltpu


def _cnn1d_fused_kernel(xcol_ref, wconv_ref, wfc_ref, out_ref, *,
                        sum_xai, batch, seq_len):
    # xcol_ref:  (K*C0, B*T)  im2col'd input: taps stacked along sublanes,
    #                         batch folded into the lane axis.
    # wconv_ref: (C1, K*C0)   conv weight with taps folded into contracting dim.
    # wfc_ref:   (C2, C1)     fc weight (torch Linear layout).
    # out_ref:   (C2, B*T)    lane-dense output slab   (or (C2, B) if sum_xai).
    h = jnp.maximum(
        jnp.dot(wconv_ref[...], xcol_ref[...], preferred_element_type=jnp.float32),
        0.0)                                                  # (C1, B*T), ReLU in f32
    out = jnp.dot(wfc_ref[...], h, preferred_element_type=jnp.float32)  # (C2, B*T)
    if sum_xai:
        # Fused time reduction: per-batch lane-slice sums (XLU), output (C2, B).
        cols = [jnp.sum(out[:, b * seq_len:(b + 1) * seq_len], axis=1, keepdims=True)
                for b in range(batch)]
        out_ref[...] = jnp.concatenate(cols, axis=1).astype(out_ref.dtype)
    else:
        out_ref[...] = out.astype(out_ref.dtype)              # single lane-dense store


def simple_1dcnn_v2_prepare_params(w_conv, w_fc):
    """One-time weight-layout glue (hoisted out of the per-call path).

    w_conv: torch Conv1d weight (C1, C0, K)  ->  (C1, K*C0), tap-major so that
    row index k*C0 + c of the contracting dim matches the im2col row order.
    """
    C1, C0, K = w_conv.shape
    w_conv_fused = jnp.transpose(w_conv, (0, 2, 1)).reshape(C1, K * C0)
    return w_conv_fused, w_fc


@functools.partial(jax.jit, static_argnames=("sum_xai",))
def simple_1dcnn_v2_forward(x, w_conv_fused, w_fc, *, sum_xai=False):
    """x: (B, C0, T); w_conv_fused: (C1, K*C0) from prepare_params; w_fc: (C2, C1)."""
    B, C0, T = x.shape
    C1, KC0 = w_conv_fused.shape
    C2, _ = w_fc.shape
    K = KC0 // C0

    # --- activation glue (fused by jit): per-batch 'same' padding + tap stacking ---
    # torch padding='same': left = (K-1)//2, right = K-1-left (handles odd and even K).
    pad_l = (K - 1) // 2
    xp = jnp.pad(x, ((0, 0), (0, 0), (pad_l, K - 1 - pad_l)))      # (B, C0, T+K-1)
    taps = jnp.stack([xp[:, :, k:k + T] for k in range(K)], axis=1)  # (B, K, C0, T)
    xcol = jnp.transpose(taps, (1, 2, 0, 3)).reshape(K * C0, B * T)  # (K*C0, B*T)

    vmem = pl.BlockSpec(memory_space=pltpu.MemorySpace.VMEM)  # full-array, VMEM-resident
    out_shape = (jax.ShapeDtypeStruct((C2, B), x.dtype) if sum_xai
                 else jax.ShapeDtypeStruct((C2, B * T), x.dtype))
    out = pl.pallas_call(
        functools.partial(_cnn1d_fused_kernel, sum_xai=sum_xai, batch=B, seq_len=T),
        out_shape=out_shape,
        in_specs=[vmem, vmem, vmem],
        out_specs=vmem,
    )(xcol, w_conv_fused, w_fc)

    if sum_xai:
        return out.T                                            # (B, C2)
    # Layout plumbing back to the module's NCL output (fused by jit).
    return jnp.transpose(out.reshape(C2, B, T), (1, 0, 2))      # (B, C2, T)


def _reference_forward(x, w_conv, w_fc):
    """Pure-JAX reference matching torch semantics (conv1d 'same', no bias)."""
    B, C0, T = x.shape
    C1, _, K = w_conv.shape
    pad_l = (K - 1) // 2
    xp = jnp.pad(x, ((0, 0), (0, 0), (pad_l, K - 1 - pad_l)))   # (B, C0, T+K-1)
    y = jnp.zeros((B, C1, T), dtype=jnp.float32)
    for k in range(K):
        y = y + jnp.einsum('bct,oc->bot', xp[:, :, k:k + T], w_conv[:, :, k])
    h = jnp.maximum(y, 0.0)                                     # ReLU (permute-invariant)
    return jnp.einsum('bct,oc->bot', h, w_fc)                   # (B, C2, T)


if __name__ == "__main__":
    # channels = [n_electrodes, 4*n_electrodes, n_sources] -> [4, 16, 8]
    B, C0, C1, C2, T, K = 2, 4, 16, 8, 16, 3

    key = jax.random.PRNGKey(0)
    kx, kw1, kw2 = jax.random.split(key, 3)
    x = jax.random.normal(kx, (B, C0, T), dtype=jnp.float32)
    # Deterministic parameter init (uniform, torch-like fan-in bounds).
    b1 = 1.0 / (C0 * K) ** 0.5
    b2 = 1.0 / C1 ** 0.5
    w_conv = jax.random.uniform(kw1, (C1, C0, K), jnp.float32, -b1, b1)
    w_fc = jax.random.uniform(kw2, (C2, C1), jnp.float32, -b2, b2)

    # One-time weight layout prep (not on the per-call path).
    w_conv_fused, w_fc_p = simple_1dcnn_v2_prepare_params(w_conv, w_fc)

    out = simple_1dcnn_v2_forward(x, w_conv_fused, w_fc_p, sum_xai=False)
    out = jax.block_until_ready(out)

    ref = _reference_forward(x, w_conv, w_fc)
    assert out.shape == (B, C2, T), out.shape
    assert jnp.allclose(out, ref, atol=1e-5, rtol=1e-5), "mismatch vs reference"

    # Exercise the fused sum_xai path as well.
    out_sum = simple_1dcnn_v2_forward(x, w_conv_fused, w_fc_p, sum_xai=True)
    out_sum = jax.block_until_ready(out_sum)
    assert out_sum.shape == (B, C2), out_sum.shape
    assert jnp.allclose(out_sum, jnp.sum(ref, axis=2), atol=1e-4, rtol=1e-4), \
        "sum_xai mismatch vs reference"

    print("KERNEL_OK")
</pallas_src>

<mosaic_0001>
module attributes {stable_mosaic.version = 11 : i64} {
  func.func @_cnn1d_fused_kernel(%arg0: memref<12x32xf32, #tpu.memory_space<vmem>>, %arg1: memref<16x12xf32, #tpu.memory_space<vmem>>, %arg2: memref<8x16xf32, #tpu.memory_space<vmem>>, %arg3: memref<8x32xf32, #tpu.memory_space<vmem>>) attributes {dimension_semantics = [], scalar_prefetch = 0 : i64, scratch_operands = 0 : i64, tpu.core_type = #tpu.core_type<tc>} {
    %c0 = arith.constant 0 : index
    %c0_0 = arith.constant 0 : index
    %0 = vector.load %arg1[%c0, %c0_0] : memref<16x12xf32, #tpu.memory_space<vmem>>, vector<16x12xf32>
    %c0_1 = arith.constant 0 : index
    %c0_2 = arith.constant 0 : index
    %1 = vector.load %arg0[%c0_1, %c0_2] : memref<12x32xf32, #tpu.memory_space<vmem>>, vector<12x32xf32>
    %cst = arith.constant dense<0.000000e+00> : vector<16x32xf32>
    %2 = tpu.matmul %0, %1, %cst {dimension_numbers = #tpu.dot_dimension_numbers<[1], [0], [0], [1], [0, 0, 1, 1], [], []>} : vector<16x12xf32>, vector<12x32xf32>, vector<16x32xf32> -> vector<16x32xf32>
    %cst_3 = arith.constant 0.000000e+00 : f32
    %3 = vector.broadcast %cst_3 : f32 to vector<16x32xf32>
    %4 = arith.maximumf %2, %3 : vector<16x32xf32>
    %c0_4 = arith.constant 0 : index
    %c0_5 = arith.constant 0 : index
    %5 = vector.load %arg2[%c0_4, %c0_5] : memref<8x16xf32, #tpu.memory_space<vmem>>, vector<8x16xf32>
    %cst_6 = arith.constant dense<0.000000e+00> : vector<8x32xf32>
    %6 = tpu.matmul %5, %4, %cst_6 {dimension_numbers = #tpu.dot_dimension_numbers<[1], [0], [0], [1], [0, 0, 1, 1], [], []>} : vector<8x16xf32>, vector<16x32xf32>, vector<8x32xf32> -> vector<8x32xf32>
    %c0_7 = arith.constant 0 : index
    %c0_8 = arith.constant 0 : index
    %7 = vector.load %arg3[%c0_7, %c0_8] : memref<8x32xf32, #tpu.memory_space<vmem>>, vector<8x32xf32>
    tpu.vector_store %arg3[%c0_7, %c0_8], %6 {strides = array<i32>} : memref<8x32xf32, #tpu.memory_space<vmem>>, vector<8x32xf32>,
    return
  }
}

</mosaic_0001>

<llo_original>
// kernel: simple_1dcnn_v2_forward.1
$region0: #{simple_1dcnn_v2_forward.1}
  #allocation0 [shape = 'u32[]', space=smem, size = 0x4, offset = 0x4, fixed_abs, tag = 'smem constant byte address 0x4 - core index']
  #allocation1 [shape = 'u32[72,128]{1,0:T(1,128)}', space=vmem, size = 0x9000, scoped, tag = 'internal scratch']
  %s0 = inlined_call_operand.vmem [shape: f32[12,32], index: 0, kind: input, shape index: {}]
  %s1 = inlined_call_operand.vmem [shape: f32[16,12], index: 1, kind: input, shape index: {}]
  %s2 = inlined_call_operand.vmem [shape: f32[8,16], index: 2, kind: input, shape index: {}]
  %s3 = inlined_call_operand.vmem [shape: f32[8,32], index: 3, kind: output, shape index: {}]
  %s4 = sld [smem:[#allocation0]]
  $region22: #{simple_1dcnn_v2_forward.1} parent=0
    _
  %s6 = ssub.s32 1, %s4
  %s7 = scalar_select 0, %s6, %s4
  // Predicated region
  $region2: #{simple_1dcnn_v2_forward.1} parent=0 // pred_check
    _
  $region3: #{simple_1dcnn_v2_forward.1} parent=0 // pred_check_branch
    %9 = sbr.rel (0) target = $region5
  $region4: #{simple_1dcnn_v2_forward.1} parent=0 // pred_region
    _
  $region5: #{simple_1dcnn_v2_forward.1} parent=0 // pred_fallthru
    _
  // Predicated region
  $region6: #{simple_1dcnn_v2_forward.1} parent=0 // pred_check
    _
  $region7: #{simple_1dcnn_v2_forward.1} parent=0 // pred_check_branch
    %11 = sbr.rel (0) target = $region9
  $region8: #{simple_1dcnn_v2_forward.1} parent=0 // pred_region
    _
  $region9: #{simple_1dcnn_v2_forward.1} parent=0 // pred_fallthru
    _
  // Predicated region
  $region10: #{simple_1dcnn_v2_forward.1} parent=0 // pred_check
    _
  $region11: #{simple_1dcnn_v2_forward.1} parent=0 // pred_check_branch
    %13 = sbr.rel (0) target = $region13
  $region12: #{simple_1dcnn_v2_forward.1} parent=0 // pred_region
    _
  $region13: #{simple_1dcnn_v2_forward.1} parent=0 // pred_fallthru
    _
  %v14 = vld [vmem:[%s1] sm:$0xff]
  %v15 = vld [vmem:[%s1 + $0x8] sm:$0xff]
  %v16 = vld [vmem:[%s0] sm:$0xff]
  %v17 = vld [vmem:[%s0 + $0x8] sm:$0xf]
  %vm18 = vcmask 97280
  %v20 = vsel %vm18, %v14, 0
  %v23 = vsel %vm18, %v15, 0
  %vm25 = vcmask 1043456
  %v27 = vsel %vm25, %v17, 0
  %29 = vmatpush.msra.mxu0 0.0
  %30 = vmatpush.msra.mxu0 0.0
  %31 = vmatpush.msra.mxu0 0.0
  %32 = vmatpush.msra.mxu0 0.0
  %33 = vmatpush.msra.mxu0 0.0
  %34 = vmatpush.msra.mxu0 0.0
  %35 = vmatpush.msra.mxu0 0.0
  %36 = vmatpush.msra.mxu0 0.0
  %37 = vmatpush.msra.mxu0 0.0
  %38 = vmatpush.msra.mxu0 0.0
  %39 = vmatpush.msra.mxu0 0.0
  %40 = vmatpush.msra.mxu0 0.0
  %41 = vmatpush.msra.mxu0 0.0
  %42 = vmatpush.msra.mxu0 0.0
  %43 = vmatpush.msra.mxu0 %v27
  %44 = vmatpush.msra.mxu0 %v16
  %45 = vmatmul.f32.gmra.mxu0 %v20
  %v46 = vpop.f32.mrf.mxu0
  %v47 = vadd.f32 0.0, %v46
  %48 = vmatmul.f32.gmra.mxu0 %v23
  %v49 = vpop.f32.mrf.mxu0
  %v50 = vadd.f32 0.0, %v49
  %51 = vdwg.mxu0
  %v52 = vmax.f32 %v47, 0.0
  %v53 = vmax.f32 %v50, 0.0
  %v54 = vld [vmem:[%s2] sm:$0xff]
  %vm55 = vcmask 130048
  %v57 = vsel %vm55, %v54, 0
  %59 = vmatpush.msra.mxu0 0.0
  %60 = vmatpush.msra.mxu0 0.0
  %61 = vmatpush.msra.mxu0 0.0
  %62 = vmatpush.msra.mxu0 0.0
  %63 = vmatpush.msra.mxu0 0.0
  %64 = vmatpush.msra.mxu0 0.0
  %65 = vmatpush.msra.mxu0 0.0
  %66 = vmatpush.msra.mxu0 0.0
  %67 = vmatpush.msra.mxu0 0.0
  %68 = vmatpush.msra.mxu0 0.0
  %69 = vmatpush.msra.mxu0 0.0
  %70 = vmatpush.msra.mxu0 0.0
  %71 = vmatpush.msra.mxu0 0.0
  %72 = vmatpush.msra.mxu0 0.0
  %73 = vmatpush.msra.mxu0 %v53
  %74 = vmatpush.msra.mxu0 %v52
  %75 = vmatmul.f32.gmra.mxu0 %v57
  %v76 = vpop.f32.mrf.mxu0
  %v77 = vadd.f32 0.0, %v76
  %78 = vdwg.mxu0
  %vm79 = vcmask 261120
  %80 = vst.msk [vmem:[%s3] sm:$0xff] %vm79, %v77
  // Predicated region
  $region14: #{simple_1dcnn_v2_forward.1} parent=0 // pred_check
    _
  $region15: #{simple_1dcnn_v2_forward.1} parent=0 // pred_check_branch
    %82 = sbr.rel (0) target = $region17
  $region16: #{simple_1dcnn_v2_forward.1} parent=0 // pred_region
    _
  $region17: #{simple_1dcnn_v2_forward.1} parent=0 // pred_fallthru
    _
  // Predicated region
  $region18: #{simple_1dcnn_v2_forward.1} parent=0 // pred_check
    _
  $region19: #{simple_1dcnn_v2_forward.1} parent=0 // pred_check_branch
    %84 = sbr.rel (0) target = $region21
  $region20: #{simple_1dcnn_v2_forward.1} parent=0 // pred_region
    _
  $region21: #{simple_1dcnn_v2_forward.1} parent=0 // pred_fallthru
    _

</llo_original>
